<compile_context>
chip_gen: v5e
topology: v5e:2x2
jax: 0.10.0
libtpu: 0.0.40
codegen_flags: <defaults>
</compile_context>

<pallas_src>
import functools

import jax
import jax.numpy as jnp
from jax import lax
from jax.experimental import pallas as pl
from jax.experimental.pallas import tpu as pltpu

_BN_EPS = 1e-5  # torch.nn.BatchNorm1d default eps


# --------------------------------------------------------------------------
# Kernel: fused MLP forward for one batch tile.
#   refs = (x_ref, [w0, scale0, shift0, w1, scale1, shift1, ...], o_ref)
#   w_l      : (D_in_l, D_out_l)   (already transposed -> x @ w)
#   scale_l  : (1, D_out_l)        (BN gamma * rsqrt(var+eps), or 1)
#   shift_l  : (1, D_out_l)        ((bias - mean) * scale + beta, or bias)
# --------------------------------------------------------------------------
def _make_predictor_kernel(num_layers: int):
    def kernel(*refs):
        x_ref = refs[0]
        o_ref = refs[-1]
        wrefs = refs[1:-1]

        h = x_ref[...].astype(jnp.float32)                    # (TB, D_in)
        for l in range(num_layers):
            w = wrefs[3 * l][...]                             # (D_in, D_out)
            scale = wrefs[3 * l + 1][...]                     # (1, D_out) f32
            shift = wrefs[3 * l + 2][...]                     # (1, D_out) f32
            # MXU matmul with f32 accumulation (inputs may be bf16).
            y = jnp.dot(h.astype(w.dtype), w,
                        preferred_element_type=jnp.float32)   # (TB, D_out)
            y = y * scale + shift                             # folded bias + BN(eval)
            if l < num_layers - 1:
                y = jnp.maximum(y, 0.0)                       # ReLU on hidden layers
            h = y
        o_ref[...] = h.astype(o_ref.dtype)

    return kernel


# --------------------------------------------------------------------------
# Wrapper
# --------------------------------------------------------------------------
@functools.partial(jax.jit, static_argnames=("block_b",))
def predictor_forward(x, folded, *, block_b=128):
    """Run Predictor.forward (eval-mode BN) on a batch x of shape (B, D_in).

    folded: tuple of (W_t, scale, shift) per linear layer:
        W_t   : (D_in_l, D_out_l)
        scale : (1, D_out_l) float32
        shift : (1, D_out_l) float32
    """
    B, d_in = x.shape
    num_layers = len(folded)
    d_out = folded[-1][0].shape[1]

    # Batch tile: multiple of 8 sublanes, or the full batch.
    tb = block_b
    if B % tb != 0 or (tb % 8 != 0 and tb != B):
        tb = B
    grid = (B // tb,)

    in_specs = [pl.BlockSpec((tb, d_in), lambda i: (i, 0))]
    flat_inputs = [x]
    flops = 0
    bytes_accessed = x.size * jnp.dtype(x.dtype).itemsize
    for (w, s, b) in folded:
        # Constant index_map -> weights stay resident in VMEM across grid steps.
        in_specs.append(pl.BlockSpec(w.shape, lambda i: (0, 0)))
        in_specs.append(pl.BlockSpec(s.shape, lambda i: (0, 0)))
        in_specs.append(pl.BlockSpec(b.shape, lambda i: (0, 0)))
        flat_inputs += [w, s, b]
        flops += 2 * B * w.shape[0] * w.shape[1] + 3 * B * w.shape[1]
        bytes_accessed += (w.size * jnp.dtype(w.dtype).itemsize
                           + s.size * 4 + b.size * 4)
    bytes_accessed += B * d_out * jnp.dtype(x.dtype).itemsize

    out_spec = pl.BlockSpec((tb, d_out), lambda i: (i, 0))

    return pl.pallas_call(
        _make_predictor_kernel(num_layers),
        out_shape=jax.ShapeDtypeStruct((B, d_out), x.dtype),
        grid_spec=pltpu.PrefetchScalarGridSpec(
            num_scalar_prefetch=0,
            grid=grid,
            in_specs=in_specs,
            out_specs=out_spec,
        ),
        compiler_params=pltpu.CompilerParams(
            # Independent batch tiles -> shard across TCs on v7x.
            dimension_semantics=("parallel",),
            # Sized for v7x's 64 MiB physical / 32 MiB scoped VMEM.
            vmem_limit_bytes=32 * 1024 * 1024,
        ),
        cost_estimate=pl.CostEstimate(
            flops=int(flops), transcendentals=0, bytes_accessed=int(bytes_accessed)),
    )(*flat_inputs)


def predictor_apply(x, folded, *, usenoise=False, noise_key=None, block_b=128):
    """Full Predictor.forward semantics, including the optional noise concat."""
    if usenoise:
        noise = jax.random.normal(
            noise_key, (x.shape[0], x.shape[1] // 2), dtype=x.dtype)
        x = jnp.concatenate([x, noise], axis=1)
    return predictor_forward(x, folded, block_b=block_b)


# --------------------------------------------------------------------------
# Parameter construction / folding (torch-equivalent layout)
# --------------------------------------------------------------------------
def init_predictor_params(key, opdim, layer=4, meddim=None, usebn=True,
                          lastusebn=False, usenoise=False):
    """Build torch-style params: per layer (W (out,in), b (out,), bn or None).

    bn = (gamma, beta, running_mean, running_var), eval-mode semantics.
    """
    if usenoise:
        opdim = opdim + opdim // 2
    assert layer >= 2
    if meddim is None:
        meddim = opdim
    dims = [opdim] + [meddim] * (layer - 1) + [opdim]

    params = []
    for l in range(layer):
        key, kw, kb, k1, k2, k3, k4 = jax.random.split(key, 7)
        fan_in = dims[l]
        bound = 1.0 / (fan_in ** 0.5)
        W = jax.random.uniform(kw, (dims[l + 1], dims[l]),
                               minval=-bound, maxval=bound, dtype=jnp.float32)
        b = jax.random.uniform(kb, (dims[l + 1],),
                               minval=-bound, maxval=bound, dtype=jnp.float32)
        has_bn = (usebn and l < layer - 1) or (lastusebn and l == layer - 1)
        if has_bn:
            gamma = 1.0 + 0.1 * jax.random.normal(k1, (dims[l + 1],), jnp.float32)
            beta = 0.1 * jax.random.normal(k2, (dims[l + 1],), jnp.float32)
            mean = 0.1 * jax.random.normal(k3, (dims[l + 1],), jnp.float32)
            var = 1.0 + 0.1 * jax.random.uniform(k4, (dims[l + 1],), jnp.float32)
            bn = (gamma, beta, mean, var)
        else:
            bn = None
        params.append((W, b, bn))
    return params


def fold_layer(W, b, bn, weight_dtype=jnp.float32):
    """Fold Linear bias + eval-mode BN into (W_t, scale, shift)."""
    Wt = W.T.astype(weight_dtype)                     # (D_in, D_out)
    if bn is None:
        scale = jnp.ones((1, W.shape[0]), jnp.float32)
        shift = b[None, :].astype(jnp.float32)
    else:
        gamma, beta, mean, var = bn
        s = gamma * lax.rsqrt(var + _BN_EPS)          # per-feature scale
        scale = s[None, :].astype(jnp.float32)
        shift = ((b - mean) * s + beta)[None, :].astype(jnp.float32)
    return Wt, scale, shift


# --------------------------------------------------------------------------
# Pure-JAX reference (unfolded, for verification only)
# --------------------------------------------------------------------------
def _ref_forward(x, params):
    h = x.astype(jnp.float32)
    L = len(params)
    for l, (W, b, bn) in enumerate(params):
        h = h @ W.T + b
        if bn is not None:
            gamma, beta, mean, var = bn
            h = (h - mean) * lax.rsqrt(var + _BN_EPS) * gamma + beta
        if l < L - 1:
            h = jnp.maximum(h, 0.0)
    return h.astype(x.dtype)


if __name__ == "__main__":
    key = jax.random.PRNGKey(0)
    kp, kx = jax.random.split(key)

    # Small shapes consistent with the module: batch=16, opdim=32, meddim=64,
    # layer=4, usebn=True, lastusebn=False, usenoise=False.
    B, opdim, meddim, layer = 16, 32, 64, 4

    params = init_predictor_params(kp, opdim, layer=layer, meddim=meddim,
                                   usebn=True, lastusebn=False, usenoise=False)
    folded = tuple(fold_layer(W, b, bn) for (W, b, bn) in params)

    x = jax.random.normal(kx, (B, opdim), dtype=jnp.float32)

    out = predictor_apply(x, folded, usenoise=False, block_b=8)
    jax.block_until_ready(out)

    ref = _ref_forward(x, params)
    assert out.shape == (B, opdim), out.shape
    assert jnp.allclose(out, ref, atol=1e-4, rtol=1e-4), float(
        jnp.max(jnp.abs(out - ref)))

    print("KERNEL_OK")
</pallas_src>

<mosaic_0001>
module attributes {stable_mosaic.version = 11 : i64} {
  func.func @kernel(%arg0: i32, %arg1: memref<8x32xf32, #tpu.memory_space<vmem>>, %arg2: memref<32x64xf32, #tpu.memory_space<vmem>>, %arg3: memref<1x64xf32, #tpu.memory_space<vmem>>, %arg4: memref<1x64xf32, #tpu.memory_space<vmem>>, %arg5: memref<64x64xf32, #tpu.memory_space<vmem>>, %arg6: memref<1x64xf32, #tpu.memory_space<vmem>>, %arg7: memref<1x64xf32, #tpu.memory_space<vmem>>, %arg8: memref<64x64xf32, #tpu.memory_space<vmem>>, %arg9: memref<1x64xf32, #tpu.memory_space<vmem>>, %arg10: memref<1x64xf32, #tpu.memory_space<vmem>>, %arg11: memref<64x32xf32, #tpu.memory_space<vmem>>, %arg12: memref<1x32xf32, #tpu.memory_space<vmem>>, %arg13: memref<1x32xf32, #tpu.memory_space<vmem>>, %arg14: memref<8x32xf32, #tpu.memory_space<vmem>>) attributes {dimension_semantics = [#tpu.dimension_semantics<parallel>], iteration_bounds = array<i64: 2>, scalar_prefetch = 0 : i64, scratch_operands = 0 : i64, tpu.core_type = #tpu.core_type<tc>, window_params = [{transform_indices = @transform_0, window_bounds = array<i64: 8, 32>}, {pipeline_mode = #tpu.pipeline_mode<synchronous>, transform_indices = @transform_1, window_bounds = array<i64: 32, 64>}, {pipeline_mode = #tpu.pipeline_mode<synchronous>, transform_indices = @transform_2, window_bounds = array<i64: 1, 64>}, {pipeline_mode = #tpu.pipeline_mode<synchronous>, transform_indices = @transform_3, window_bounds = array<i64: 1, 64>}, {pipeline_mode = #tpu.pipeline_mode<synchronous>, transform_indices = @transform_4, window_bounds = array<i64: 64, 64>}, {pipeline_mode = #tpu.pipeline_mode<synchronous>, transform_indices = @transform_5, window_bounds = array<i64: 1, 64>}, {pipeline_mode = #tpu.pipeline_mode<synchronous>, transform_indices = @transform_6, window_bounds = array<i64: 1, 64>}, {pipeline_mode = #tpu.pipeline_mode<synchronous>, transform_indices = @transform_7, window_bounds = array<i64: 64, 64>}, {pipeline_mode = #tpu.pipeline_mode<synchronous>, transform_indices = @transform_8, window_bounds = array<i64: 1, 64>}, {pipeline_mode = #tpu.pipeline_mode<synchronous>, transform_indices = @transform_9, window_bounds = array<i64: 1, 64>}, {pipeline_mode = #tpu.pipeline_mode<synchronous>, transform_indices = @transform_10, window_bounds = array<i64: 64, 32>}, {pipeline_mode = #tpu.pipeline_mode<synchronous>, transform_indices = @transform_11, window_bounds = array<i64: 1, 32>}, {pipeline_mode = #tpu.pipeline_mode<synchronous>, transform_indices = @transform_12, window_bounds = array<i64: 1, 32>}, {transform_indices = @transform_13, window_bounds = array<i64: 8, 32>}]} {
    %c0 = arith.constant 0 : index
    %c0_0 = arith.constant 0 : index
    %0 = vector.load %arg1[%c0, %c0_0] : memref<8x32xf32, #tpu.memory_space<vmem>>, vector<8x32xf32>
    %c0_1 = arith.constant 0 : index
    %c0_2 = arith.constant 0 : index
    %1 = vector.load %arg2[%c0_1, %c0_2] : memref<32x64xf32, #tpu.memory_space<vmem>>, vector<32x64xf32>
    %c0_3 = arith.constant 0 : index
    %c0_4 = arith.constant 0 : index
    %2 = vector.load %arg3[%c0_3, %c0_4] : memref<1x64xf32, #tpu.memory_space<vmem>>, vector<1x64xf32>
    %c0_5 = arith.constant 0 : index
    %c0_6 = arith.constant 0 : index
    %3 = vector.load %arg4[%c0_5, %c0_6] : memref<1x64xf32, #tpu.memory_space<vmem>>, vector<1x64xf32>
    %cst = arith.constant dense<0.000000e+00> : vector<8x64xf32>
    %4 = tpu.matmul %0, %1, %cst {dimension_numbers = #tpu.dot_dimension_numbers<[1], [0], [0], [1], [0, 0, 1, 1], [], []>} : vector<8x32xf32>, vector<32x64xf32>, vector<8x64xf32> -> vector<8x64xf32>
    %5 = vector.broadcast %2 : vector<1x64xf32> to vector<8x64xf32>
    %6 = arith.mulf %4, %5 : vector<8x64xf32>
    %7 = vector.broadcast %3 : vector<1x64xf32> to vector<8x64xf32>
    %8 = arith.addf %6, %7 : vector<8x64xf32>
    %cst_7 = arith.constant 0.000000e+00 : f32
    %9 = vector.broadcast %cst_7 : f32 to vector<8x64xf32>
    %10 = arith.maximumf %8, %9 : vector<8x64xf32>
    %c0_8 = arith.constant 0 : index
    %c0_9 = arith.constant 0 : index
    %11 = vector.load %arg5[%c0_8, %c0_9] : memref<64x64xf32, #tpu.memory_space<vmem>>, vector<64x64xf32>
    %c0_10 = arith.constant 0 : index
    %c0_11 = arith.constant 0 : index
    %12 = vector.load %arg6[%c0_10, %c0_11] : memref<1x64xf32, #tpu.memory_space<vmem>>, vector<1x64xf32>
    %c0_12 = arith.constant 0 : index
    %c0_13 = arith.constant 0 : index
    %13 = vector.load %arg7[%c0_12, %c0_13] : memref<1x64xf32, #tpu.memory_space<vmem>>, vector<1x64xf32>
    %cst_14 = arith.constant dense<0.000000e+00> : vector<8x64xf32>
    %14 = tpu.matmul %10, %11, %cst_14 {dimension_numbers = #tpu.dot_dimension_numbers<[1], [0], [0], [1], [0, 0, 1, 1], [], []>} : vector<8x64xf32>, vector<64x64xf32>, vector<8x64xf32> -> vector<8x64xf32>
    %15 = vector.broadcast %12 : vector<1x64xf32> to vector<8x64xf32>
    %16 = arith.mulf %14, %15 : vector<8x64xf32>
    %17 = vector.broadcast %13 : vector<1x64xf32> to vector<8x64xf32>
    %18 = arith.addf %16, %17 : vector<8x64xf32>
    %cst_15 = arith.constant 0.000000e+00 : f32
    %19 = vector.broadcast %cst_15 : f32 to vector<8x64xf32>
    %20 = arith.maximumf %18, %19 : vector<8x64xf32>
    %c0_16 = arith.constant 0 : index
    %c0_17 = arith.constant 0 : index
    %21 = vector.load %arg8[%c0_16, %c0_17] : memref<64x64xf32, #tpu.memory_space<vmem>>, vector<64x64xf32>
    %c0_18 = arith.constant 0 : index
    %c0_19 = arith.constant 0 : index
    %22 = vector.load %arg9[%c0_18, %c0_19] : memref<1x64xf32, #tpu.memory_space<vmem>>, vector<1x64xf32>
    %c0_20 = arith.constant 0 : index
    %c0_21 = arith.constant 0 : index
    %23 = vector.load %arg10[%c0_20, %c0_21] : memref<1x64xf32, #tpu.memory_space<vmem>>, vector<1x64xf32>
    %cst_22 = arith.constant dense<0.000000e+00> : vector<8x64xf32>
    %24 = tpu.matmul %20, %21, %cst_22 {dimension_numbers = #tpu.dot_dimension_numbers<[1], [0], [0], [1], [0, 0, 1, 1], [], []>} : vector<8x64xf32>, vector<64x64xf32>, vector<8x64xf32> -> vector<8x64xf32>
    %25 = vector.broadcast %22 : vector<1x64xf32> to vector<8x64xf32>
    %26 = arith.mulf %24, %25 : vector<8x64xf32>
    %27 = vector.broadcast %23 : vector<1x64xf32> to vector<8x64xf32>
    %28 = arith.addf %26, %27 : vector<8x64xf32>
    %cst_23 = arith.constant 0.000000e+00 : f32
    %29 = vector.broadcast %cst_23 : f32 to vector<8x64xf32>
    %30 = arith.maximumf %28, %29 : vector<8x64xf32>
    %c0_24 = arith.constant 0 : index
    %c0_25 = arith.constant 0 : index
    %31 = vector.load %arg11[%c0_24, %c0_25] : memref<64x32xf32, #tpu.memory_space<vmem>>, vector<64x32xf32>
    %c0_26 = arith.constant 0 : index
    %c0_27 = arith.constant 0 : index
    %32 = vector.load %arg12[%c0_26, %c0_27] : memref<1x32xf32, #tpu.memory_space<vmem>>, vector<1x32xf32>
    %c0_28 = arith.constant 0 : index
    %c0_29 = arith.constant 0 : index
    %33 = vector.load %arg13[%c0_28, %c0_29] : memref<1x32xf32, #tpu.memory_space<vmem>>, vector<1x32xf32>
    %cst_30 = arith.constant dense<0.000000e+00> : vector<8x32xf32>
    %34 = tpu.matmul %30, %31, %cst_30 {dimension_numbers = #tpu.dot_dimension_numbers<[1], [0], [0], [1], [0, 0, 1, 1], [], []>} : vector<8x64xf32>, vector<64x32xf32>, vector<8x32xf32> -> vector<8x32xf32>
    %35 = vector.broadcast %32 : vector<1x32xf32> to vector<8x32xf32>
    %36 = arith.mulf %34, %35 : vector<8x32xf32>
    %37 = vector.broadcast %33 : vector<1x32xf32> to vector<8x32xf32>
    %38 = arith.addf %36, %37 : vector<8x32xf32>
    %c0_31 = arith.constant 0 : index
    %c0_32 = arith.constant 0 : index
    %39 = vector.load %arg14[%c0_31, %c0_32] : memref<8x32xf32, #tpu.memory_space<vmem>>, vector<8x32xf32>
    tpu.vector_store %arg14[%c0_31, %c0_32], %38 {strides = array<i32>} : memref<8x32xf32, #tpu.memory_space<vmem>>, vector<8x32xf32>,
    return
  }
  func.func @transform_0(%arg0: i32) -> (i32, i32) {
    %c0_i32 = arith.constant 0 : i32
    %c0_i32_0 = arith.constant 0 : i32
    return %arg0, %c0_i32 : i32, i32
  }
  func.func @transform_1(%arg0: i32) -> (i32, i32) {
    %c0_i32 = arith.constant 0 : i32
    %c0_i32_0 = arith.constant 0 : i32
    %c0_i32_1 = arith.constant 0 : i32
    return %c0_i32, %c0_i32_0 : i32, i32
  }
  func.func @transform_2(%arg0: i32) -> (i32, i32) {
    %c0_i32 = arith.constant 0 : i32
    %c0_i32_0 = arith.constant 0 : i32
    %c0_i32_1 = arith.constant 0 : i32
    return %c0_i32, %c0_i32_0 : i32, i32
  }
  func.func @transform_3(%arg0: i32) -> (i32, i32) {
    %c0_i32 = arith.constant 0 : i32
    %c0_i32_0 = arith.constant 0 : i32
    %c0_i32_1 = arith.constant 0 : i32
    return %c0_i32, %c0_i32_0 : i32, i32
  }
  func.func @transform_4(%arg0: i32) -> (i32, i32) {
    %c0_i32 = arith.constant 0 : i32
    %c0_i32_0 = arith.constant 0 : i32
    %c0_i32_1 = arith.constant 0 : i32
    return %c0_i32, %c0_i32_0 : i32, i32
  }
  func.func @transform_5(%arg0: i32) -> (i32, i32) {
    %c0_i32 = arith.constant 0 : i32
    %c0_i32_0 = arith.constant 0 : i32
    %c0_i32_1 = arith.constant 0 : i32
    return %c0_i32, %c0_i32_0 : i32, i32
  }
  func.func @transform_6(%arg0: i32) -> (i32, i32) {
    %c0_i32 = arith.constant 0 : i32
    %c0_i32_0 = arith.constant 0 : i32
    %c0_i32_1 = arith.constant 0 : i32
    return %c0_i32, %c0_i32_0 : i32, i32
  }
  func.func @transform_7(%arg0: i32) -> (i32, i32) {
    %c0_i32 = arith.constant 0 : i32
    %c0_i32_0 = arith.constant 0 : i32
    %c0_i32_1 = arith.constant 0 : i32
    return %c0_i32, %c0_i32_0 : i32, i32
  }
  func.func @transform_8(%arg0: i32) -> (i32, i32) {
    %c0_i32 = arith.constant 0 : i32
    %c0_i32_0 = arith.constant 0 : i32
    %c0_i32_1 = arith.constant 0 : i32
    return %c0_i32, %c0_i32_0 : i32, i32
  }
  func.func @transform_9(%arg0: i32) -> (i32, i32) {
    %c0_i32 = arith.constant 0 : i32
    %c0_i32_0 = arith.constant 0 : i32
    %c0_i32_1 = arith.constant 0 : i32
    return %c0_i32, %c0_i32_0 : i32, i32
  }
  func.func @transform_10(%arg0: i32) -> (i32, i32) {
    %c0_i32 = arith.constant 0 : i32
    %c0_i32_0 = arith.constant 0 : i32
    %c0_i32_1 = arith.constant 0 : i32
    return %c0_i32, %c0_i32_0 : i32, i32
  }
  func.func @transform_11(%arg0: i32) -> (i32, i32) {
    %c0_i32 = arith.constant 0 : i32
    %c0_i32_0 = arith.constant 0 : i32
    %c0_i32_1 = arith.constant 0 : i32
    return %c0_i32, %c0_i32_0 : i32, i32
  }
  func.func @transform_12(%arg0: i32) -> (i32, i32) {
    %c0_i32 = arith.constant 0 : i32
    %c0_i32_0 = arith.constant 0 : i32
    %c0_i32_1 = arith.constant 0 : i32
    return %c0_i32, %c0_i32_0 : i32, i32
  }
  func.func @transform_13(%arg0: i32) -> (i32, i32) {
    %c0_i32 = arith.constant 0 : i32
    %c0_i32_0 = arith.constant 0 : i32
    return %arg0, %c0_i32 : i32, i32
  }
}

</mosaic_0001>

<llo_original>
// kernel: predictor_forward.1
$region0: #{predictor_forward.1}
  #allocation0 [shape = 'u32[]', space=smem, size = 0x4, offset = 0x4, fixed_abs, tag = 'smem constant byte address 0x4 - core index']
  #allocation1 [shape = 'u32[72,128]{1,0:T(1,128)}', space=vmem, size = 0x9000, scoped, tag = 'internal scratch']
  %s0 = inlined_call_operand.hbm [shape: f32[16,32], index: 0, kind: input, shape index: {}]
  %s1 = inlined_call_operand.vmem [shape: f32[32,64], index: 1, kind: input, shape index: {}]
  %s2 = inlined_call_operand.vmem [shape: f32[1,64], index: 2, kind: input, shape index: {}]
  %s3 = inlined_call_operand.vmem [shape: f32[1,64], index: 3, kind: input, shape index: {}]
  %s4 = inlined_call_operand.vmem [shape: f32[64,64], index: 4, kind: input, shape index: {}]
  %s5 = inlined_call_operand.vmem [shape: f32[1,64], index: 5, kind: input, shape index: {}]
  %s6 = inlined_call_operand.vmem [shape: f32[1,64], index: 6, kind: input, shape index: {}]
  %s7 = inlined_call_operand.hbm [shape: f32[64,64], index: 7, kind: input, shape index: {}]
  %s8 = inlined_call_operand.vmem [shape: f32[1,64], index: 8, kind: input, shape index: {}]
  %s9 = inlined_call_operand.vmem [shape: f32[1,64], index: 9, kind: input, shape index: {}]
  %s10 = inlined_call_operand.vmem [shape: f32[64,32], index: 10, kind: input, shape index: {}]
  %s11 = inlined_call_operand.vmem [shape: f32[1,32], index: 11, kind: input, shape index: {}]
  %s12 = inlined_call_operand.vmem [shape: f32[1,32], index: 12, kind: input, shape index: {}]
  %s13 = inlined_call_operand.hbm [shape: f32[16,32], index: 13, kind: output, shape index: {}]
  %s14 = sld [smem:[#allocation0]]
  $region93: #{predictor_forward.1} parent=0
    _
  %s16 = ssub.s32 1, %s14
  %s17 = scalar_select 0, %s16, %s14
  $region1: #{predictor_forward.1} parent=0
    #allocation2 [shape = 'u8[8192]{0}', space=vmem, size = 0x2000, scoped, tag = 'input window, operand 0']
    #allocation3 [shape = 's32[2]{0}', space=sflag, size = 0x8, scoped, tag = 'scoped memory for predictor_forward.1']
    #allocation4 [shape = 's32[2]{0}', space=sflag, size = 0x8, scoped, tag = 'scoped memory for predictor_forward.1']
    #allocation5 [shape = 'u8[32768]{0}', space=vmem, size = 0x8000, scoped, tag = 'input window, operand 7, single buffered']
    #allocation6 [shape = 's32[1]{0}', space=sflag, size = 0x4, scoped, tag = 'scoped memory for predictor_forward.1']
    #allocation7 [shape = 'u8[8192]{0}', space=vmem, size = 0x2000, scoped, tag = 'output window, operand 0']
    %18 = vsyncpa [#allocation3], 0
    %s19 = scalar_lea.sflag [#allocation3], 1
    %20 = vsyncpa %s19, 0
    %21 = vsyncpa [#allocation6], 0
    %22 = vsyncpa [#allocation4], 0
    %s23 = scalar_lea.sflag [#allocation4], 1
    %24 = vsyncpa %s23, 0
    loop: start=0, step=1, limit=4
    $region2: #{predictor_forward.1} parent=1 // loop_pre_header
      _
    $region3: #{predictor_forward.1} parent=1 // loop_header
      %s26 = sphi 0, %s30
      %p27 = scmp.ge.s32.totalorder %s26, 4
      %s36 = sphi 0, %s38
      %s39 = sphi 0, %s36
      %s40 = sphi 0, %s39
      %s56 = sphi 0, %s40
      %s60 = sphi 0, %s60
      %s62 = sphi 0, %s60
      %s63 = sphi 0, %s62
      %s77 = sphi 0, %s63
      %s81 = sphi 0, %s81
      %s83 = sphi 0, %s81
      %s84 = sphi 0, %s83
      %s98 = sphi 0, %s84
      %s102 = sphi 0, %s102
      %s104 = sphi 0, %s102
      %s105 = sphi 0, %s104
      %s119 = sphi 0, %s105
      %s123 = sphi 0, %s123
      %s125 = sphi 0, %s123
      %s126 = sphi 0, %s125
      %s140 = sphi 0, %s126
      %s144 = sphi 0, %s144
      %s146 = sphi 0, %s144
      %s147 = sphi 0, %s146
      %s161 = sphi 0, %s147
      %s165 = sphi 0, %s165
      %s167 = sphi 0, %s165
      %s168 = sphi 0, %s167
      %s182 = sphi 0, %s168
      %s186 = sphi 0, %s186
      %s188 = sphi 0, %s186
      %s189 = sphi 0, %s188
      %s203 = sphi 0, %s189
      %s207 = sphi 0, %s207
      %s209 = sphi 0, %s207
      %s210 = sphi 0, %s209
      %s224 = sphi 0, %s210
      %s228 = sphi 0, %s228
      %s230 = sphi 0, %s228
      %s231 = sphi 0, %s230
      %s245 = sphi 0, %s231
      %s249 = sphi 0, %s249
      %s251 = sphi 0, %s249
      %s252 = sphi 0, %s251
      %s266 = sphi 0, %s252
      %s270 = sphi 0, %s270
      %s272 = sphi 0, %s270
      %s273 = sphi 0, %s272
      %s287 = sphi 0, %s273
      %s291 = sphi 0, %s291
      %s293 = sphi 0, %s291
      %s294 = sphi 0, %s293
      %s308 = sphi 0, %s294
      %s314 = sphi 0, %s316
      %s317 = sphi 0, %s314
      %s318 = sphi 0, %s317
      %s334 = sphi 0, %s318
    $region4: #{predictor_forward.1} parent=1 // loop_header_branch
      %29 = sbr.rel (%p27) target = $region8
    $region5: #{predictor_forward.1} parent=1 // loop_body
      %s31 = ssub.s32 %s26, 1
      %s32 = ssub.s32 %s26, 2
      %s33 = sadd.s32 %s26, 1
      %s34 = ssub.s32 %s26, %s33
      %p35 = scmp.eq.s32.totalorder %s34, 0
      %s37 = sadd.s32 %s36, 1
      %s38 = scalar_select %p35, %s36, %s37
      %p41 = pneg %p35
      %p42 = scmp.eq.s32.totalorder %s26, 1
      %p43 = por %p41, %p42
      %p44 = scmp.ne.s32.totalorder %s36, %s39
      %p45 = scmp.eq.s32.totalorder %s26, 0
      %p46 = por %p44, %p45
      %p47 = scmp.ne.s32.totalorder %s36, %s39
      %p48 = scmp.eq.s32.totalorder %s31, 1
      %p49 = por %p47, %p48
      %p50 = scmp.ne.s32.totalorder %s39, %s40
      %p51 = scmp.eq.s32.totalorder %s31, 0
      %p52 = por %p50, %p51
      %p53 = scmp.ne.s32.totalorder %s39, %s40
      %p54 = scmp.eq.s32.totalorder %s32, 1
      %p55 = por %p53, %p54
      %p57 = scmp.ne.s32.totalorder %s40, %s56
      %p58 = scmp.eq.s32.totalorder %s32, 0
      %p59 = por %p57, %p58
      %s61 = sadd.s32 %s60, 1
      %p64 = scmp.eq.s32.totalorder %s26, 1
      %p65 = scmp.ne.s32.totalorder %s60, %s62
      %p66 = scmp.eq.s32.totalorder %s26, 0
      %p67 = por %p65, %p66
      %p68 = scmp.ne.s32.totalorder %s60, %s62
      %p69 = scmp.eq.s32.totalorder %s31, 1
      %p70 = por %p68, %p69
      %p71 = scmp.ne.s32.totalorder %s62, %s63
      %p72 = scmp.eq.s32.totalorder %s31, 0
      %p73 = por %p71, %p72
      %p74 = scmp.ne.s32.totalorder %s62, %s63
      %p75 = scmp.eq.s32.totalorder %s32, 1
      %p76 = por %p74, %p75
      %p78 = scmp.ne.s32.totalorder %s63, %s77
      %p79 = scmp.eq.s32.totalorder %s32, 0
      %p80 = por %p78, %p79
      %s82 = sadd.s32 %s81, 1
      %p85 = scmp.eq.s32.totalorder %s26, 1
      %p86 = scmp.ne.s32.totalorder %s81, %s83
      %p87 = scmp.eq.s32.totalorder %s26, 0
      %p88 = por %p86, %p87
      %p89 = scmp.ne.s32.totalorder %s81, %s83
      %p90 = scmp.eq.s32.totalorder %s31, 1
      %p91 = por %p89, %p90
      %p92 = scmp.ne.s32.totalorder %s83, %s84
      %p93 = scmp.eq.s32.totalorder %s31, 0
      %p94 = por %p92, %p93
      %p95 = scmp.ne.s32.totalorder %s83, %s84
      %p96 = scmp.eq.s32.totalorder %s32, 1
      %p97 = por %p95, %p96
      %p99 = scmp.ne.s32.totalorder %s84, %s98
      %p100 = scmp.eq.s32.totalorder %s32, 0
      %p101 = por %p99, %p100
      %s103 = sadd.s32 %s102, 1
      %p106 = scmp.eq.s32.totalorder %s26, 1
      %p107 = scmp.ne.s32.totalorder %s102, %s104
      %p108 = scmp.eq.s32.totalorder %s26, 0
      %p109 = por %p107, %p108
      %p110 = scmp.ne.s32.totalorder %s102, %s104
      %p111 = scmp.eq.s32.totalorder %s31, 1
      %p112 = por %p110, %p111
      %p113 = scmp.ne.s32.totalorder %s104, %s105
      %p114 = scmp.eq.s32.totalorder %s31, 0
      %p115 = por %p113, %p114
      %p116 = scmp.ne.s32.totalorder %s104, %s105
      %p117 = scmp.eq.s32.totalorder %s32, 1
      %p118 = por %p116, %p117
      %p120 = scmp.ne.s32.totalorder %s105, %s119
      %p121 = scmp.eq.s32.totalorder %s32, 0
      %p122 = por %p120, %p121
      %s124 = sadd.s32 %s123, 1
      %p127 = scmp.eq.s32.totalorder %s26, 1
      %p128 = scmp.ne.s32.totalorder %s123, %s125
      %p129 = scmp.eq.s32.totalorder %s26, 0
      %p130 = por %p128, %p129
      %p131 = scmp.ne.s32.totalorder %s123, %s125
      %p132 = scmp.eq.s32.totalorder %s31, 1
      %p133 = por %p131, %p132
      %p134 = scmp.ne.s32.totalorder %s125, %s126
      %p135 = scmp.eq.s32.totalorder %s31, 0
      %p136 = por %p134, %p135
      %p137 = scmp.ne.s32.totalorder %s125, %s126
      %p138 = scmp.eq.s32.totalorder %s32, 1
      %p139 = por %p137, %p138
      %p141 = scmp.ne.s32.totalorder %s126, %s140
      %p142 = scmp.eq.s32.totalorder %s32, 0
      %p143 = por %p141, %p142
      %s145 = sadd.s32 %s144, 1
      %p148 = scmp.eq.s32.totalorder %s26, 1
      %p149 = scmp.ne.s32.totalorder %s144, %s146
      %p150 = scmp.eq.s32.totalorder %s26, 0
      %p151 = por %p149, %p150
      %p152 = scmp.ne.s32.totalorder %s144, %s146
      %p153 = scmp.eq.s32.totalorder %s31, 1
      %p154 = por %p152, %p153
      %p155 = scmp.ne.s32.totalorder %s146, %s147
      %p156 = scmp.eq.s32.totalorder %s31, 0
      %p157 = por %p155, %p156
      %p158 = scmp.ne.s32.totalorder %s146, %s147
      %p159 = scmp.eq.s32.totalorder %s32, 1
      %p160 = por %p158, %p159
      %p162 = scmp.ne.s32.totalorder %s147, %s161
      %p163 = scmp.eq.s32.totalorder %s32, 0
      %p164 = por %p162, %p163
      %s166 = sadd.s32 %s165, 1
      %p169 = scmp.eq.s32.totalorder %s26, 1
      %p170 = scmp.ne.s32.totalorder %s165, %s167
      %p171 = scmp.eq.s32.totalorder %s26, 0
      %p172 = por %p170, %p171
      %p173 = scmp.ne.s32.totalorder %s165, %s167
      %p174 = scmp.eq.s32.totalorder %s31, 1
      %p175 = por %p173, %p174
      %p176 = scmp.ne.s32.totalorder %s167, %s168
      %p177 = scmp.eq.s32.totalorder %s31, 0
      %p178 = por %p176, %p177
      %p179 = scmp.ne.s32.totalorder %s167, %s168
      %p180 = scmp.eq.s32.totalorder %s32, 1
      %p181 = por %p179, %p180
      %p183 = scmp.ne.s32.totalorder %s168, %s182
      %p184 = scmp.eq.s32.totalorder %s32, 0
      %p185 = por %p183, %p184
      %s187 = sadd.s32 %s186, 1
      %p190 = scmp.eq.s32.totalorder %s26, 1
      %p191 = scmp.ne.s32.totalorder %s186, %s188
      %p192 = scmp.eq.s32.totalorder %s26, 0
      %p193 = por %p191, %p192
      %p194 = scmp.ne.s32.totalorder %s186, %s188
      %p195 = scmp.eq.s32.totalorder %s31, 1
      %p196 = por %p194, %p195
      %p197 = scmp.ne.s32.totalorder %s188, %s189
      %p198 = scmp.eq.s32.totalorder %s31, 0
      %p199 = por %p197, %p198
      %p200 = scmp.ne.s32.totalorder %s188, %s189
      %p201 = scmp.eq.s32.totalorder %s32, 1
      %p202 = por %p200, %p201
      %p204 = scmp.ne.s32.totalorder %s189, %s203
      %p205 = scmp.eq.s32.totalorder %s32, 0
      %p206 = por %p204, %p205
      %s208 = sadd.s32 %s207, 1
      %p211 = scmp.eq.s32.totalorder %s26, 1
      %p212 = scmp.ne.s32.totalorder %s207, %s209
      %p213 = scmp.eq.s32.totalorder %s26, 0
      %p214 = por %p212, %p213
      %p215 = scmp.ne.s32.totalorder %s207, %s209
      %p216 = scmp.eq.s32.totalorder %s31, 1
      %p217 = por %p215, %p216
      %p218 = scmp.ne.s32.totalorder %s209, %s210
      %p219 = scmp.eq.s32.totalorder %s31, 0
      %p220 = por %p218, %p219
      %p221 = scmp.ne.s32.totalorder %s209, %s210
      %p222 = scmp.eq.s32.totalorder %s32, 1
      %p223 = por %p221, %p222
      %p225 = scmp.ne.s32.totalorder %s210, %s224
      %p226 = scmp.eq.s32.totalorder %s32, 0
      %p227 = por %p225, %p226
      %s229 = sadd.s32 %s228, 1
      %p232 = scmp.eq.s32.totalorder %s26, 1
      %p233 = scmp.ne.s32.totalorder %s228, %s230
      %p234 = scmp.eq.s32.totalorder %s26, 0
      %p235 = por %p233, %p234
      %p236 = scmp.ne.s32.totalorder %s228, %s230
      %p237 = scmp.eq.s32.totalorder %s31, 1
      %p238 = por %p236, %p237
      %p239 = scmp.ne.s32.totalorder %s230, %s231
      %p240 = scmp.eq.s32.totalorder %s31, 0
      %p241 = por %p239, %p240
      %p242 = scmp.ne.s32.totalorder %s230, %s231
      %p243 = scmp.eq.s32.totalorder %s32, 1
      %p244 = por %p242, %p243
      %p246 = scmp.ne.s32.totalorder %s231, %s245
      %p247 = scmp.eq.s32.totalorder %s32, 0
      %p248 = por %p246, %p247
      %s250 = sadd.s32 %s249, 1
      %p253 = scmp.eq.s32.totalorder %s26, 1
      %p254 = scmp.ne.s32.totalorder %s249, %s251
      %p255 = scmp.eq.s32.totalorder %s26, 0
      %p256 = por %p254, %p255
      %p257 = scmp.ne.s32.totalorder %s249, %s251
      %p258 = scmp.eq.s32.totalorder %s31, 1
      %p259 = por %p257, %p258
      %p260 = scmp.ne.s32.totalorder %s251, %s252
      %p261 = scmp.eq.s32.totalorder %s31, 0
      %p262 = por %p260, %p261
      %p263 = scmp.ne.s32.totalorder %s251, %s252
      %p264 = scmp.eq.s32.totalorder %s32, 1
      %p265 = por %p263, %p264
      %p267 = scmp.ne.s32.totalorder %s252, %s266
      %p268 = scmp.eq.s32.totalorder %s32, 0
      %p269 = por %p267, %p268
      %s271 = sadd.s32 %s270, 1
      %p274 = scmp.eq.s32.totalorder %s26, 1
      %p275 = scmp.ne.s32.totalorder %s270, %s272
      %p276 = scmp.eq.s32.totalorder %s26, 0
      %p277 = por %p275, %p276
      %p278 = scmp.ne.s32.totalorder %s270, %s272
      %p279 = scmp.eq.s32.totalorder %s31, 1
      %p280 = por %p278, %p279
      %p281 = scmp.ne.s32.totalorder %s272, %s273
      %p282 = scmp.eq.s32.totalorder %s31, 0
      %p283 = por %p281, %p282
      %p284 = scmp.ne.s32.totalorder %s272, %s273
      %p285 = scmp.eq.s32.totalorder %s32, 1
      %p286 = por %p284, %p285
      %p288 = scmp.ne.s32.totalorder %s273, %s287
      %p289 = scmp.eq.s32.totalorder %s32, 0
      %p290 = por %p288, %p289
      %s292 = sadd.s32 %s291, 1
      %p295 = scmp.eq.s32.totalorder %s26, 1
      %p296 = scmp.ne.s32.totalorder %s291, %s293
      %p297 = scmp.eq.s32.totalorder %s26, 0
      %p298 = por %p296, %p297
      %p299 = scmp.ne.s32.totalorder %s291, %s293
      %p300 = scmp.eq.s32.totalorder %s31, 1
      %p301 = por %p299, %p300
      %p302 = scmp.ne.s32.totalorder %s293, %s294
      %p303 = scmp.eq.s32.totalorder %s31, 0
      %p304 = por %p302, %p303
      %p305 = scmp.ne.s32.totalorder %s293, %s294
      %p306 = scmp.eq.s32.totalorder %s32, 1
      %p307 = por %p305, %p306
      %p309 = scmp.ne.s32.totalorder %s294, %s308
      %p310 = scmp.eq.s32.totalorder %s32, 0
      %p311 = por %p309, %p310
      %s312 = ssub.s32 %s26, %s33
      %p313 = scmp.eq.s32.totalorder %s312, 0
      %s315 = sadd.s32 %s314, 1
      %s316 = scalar_select %p313, %s314, %s315
      %p319 = pneg %p313
      %p320 = scmp.eq.s32.totalorder %s26, 1
      %p321 = por %p319, %p320
      %p322 = scmp.ne.s32.totalorder %s314, %s317
      %p323 = scmp.eq.s32.totalorder %s26, 0
      %p324 = por %p322, %p323
      %p325 = scmp.ne.s32.totalorder %s314, %s317
      %p326 = scmp.eq.s32.totalorder %s31, 1
      %p327 = por %p325, %p326
      %p328 = scmp.ne.s32.totalorder %s317, %s318
      %p329 = scmp.eq.s32.totalorder %s31, 0
      %p330 = por %p328, %p329
      %p331 = scmp.ne.s32.totalorder %s317, %s318
      %p332 = scmp.eq.s32.totalorder %s32, 1
      %p333 = por %p331, %p332
      %p335 = scmp.ne.s32.totalorder %s318, %s334
      %p336 = scmp.eq.s32.totalorder %s32, 0
      %p337 = por %p335, %p336
      %p338 = scmp.le.s32.totalorder 1, %s26
      %p339 = scmp.lt.s32.totalorder %s26, 3
      %p340 = pnand %p338, %p339
      %p341 = pneg %p340
      // Predicated region
      $region9: #{predictor_forward.1} parent=5 // pred_check
        _
      $region10: #{predictor_forward.1} parent=5 // pred_check_branch
        %343 = sbr.rel (%p340) target = $region12
      $region11: #{predictor_forward.1} parent=5 // pred_region
        %s344 = ssub.s32 %s26, 1
        // Predicated region
        $region13: #{predictor_forward.1} parent=11 // pred_check
          %p345 = pneg %p73
        $region14: #{predictor_forward.1} parent=11 // pred_check_branch
          %347 = sbr.rel (%p345) target = $region16
        $region15: #{predictor_forward.1} parent=11 // pred_region
          _
        $region16: #{predictor_forward.1} parent=11 // pred_fallthru
          _
        // Predicated region
        $region17: #{predictor_forward.1} parent=11 // pred_check
          %p348 = pneg %p94
        $region18: #{predictor_forward.1} parent=11 // pred_check_branch
          %350 = sbr.rel (%p348) target = $region20
        $region19: #{predictor_forward.1} parent=11 // pred_region
          _
        $region20: #{predictor_forward.1} parent=11 // pred_fallthru
          _
        // Predicated region
        $region21: #{predictor_forward.1} parent=11 // pred_check
          %p351 = pneg %p115
        $region22: #{predictor_forward.1} parent=11 // pred_check_branch
          %353 = sbr.rel (%p351) target = $region24
        $region23: #{predictor_forward.1} parent=11 // pred_region
          _
        $region24: #{predictor_forward.1} parent=11 // pred_fallthru
          _
        // Predicated region
        $region25: #{predictor_forward.1} parent=11 // pred_check
          %p354 = pneg %p136
        $region26: #{predictor_forward.1} parent=11 // pred_check_branch
          %356 = sbr.rel (%p354) target = $region28
        $region27: #{predictor_forward.1} parent=11 // pred_region
          _
        $region28: #{predictor_forward.1} parent=11 // pred_fallthru
          _
        // Predicated region
        $region29: #{predictor_forward.1} parent=11 // pred_check
          %p357 = pneg %p157
        $region30: #{predictor_forward.1} parent=11 // pred_check_branch
          %359 = sbr.rel (%p357) target = $region32
        $region31: #{predictor_forward.1} parent=11 // pred_region
          _
        $region32: #{predictor_forward.1} parent=11 // pred_fallthru
          _
        // Predicated region
        $region33: #{predictor_forward.1} parent=11 // pred_check
          %p360 = pneg %p178
        $region34: #{predictor_forward.1} parent=11 // pred_check_branch
          %362 = sbr.rel (%p360) target = $region36
        $region35: #{predictor_forward.1} parent=11 // pred_region
          _
        $region36: #{predictor_forward.1} parent=11 // pred_fallthru
          _
        // Predicated region
        $region37: #{predictor_forward.1} parent=11 // pred_check
          %p363 = pneg %p199
        $region38: #{predictor_forward.1} parent=11 // pred_check_branch
          %365 = sbr.rel (%p363) target = $region40
        $region39: #{predictor_forward.1} parent=11 // pred_region
          %367 = vsyncadd [#allocation6], 0
          %s368 = sshll.u32 %s7, 4
          %s369 = int_to_ptr.hbm [resolvable:$true] %s368
          %s370 = sshll.u32 [#allocation5], 4
          %s371 = int_to_ptr.vmem [resolvable:$true] %s370
          %376 = dma.hbm_to_vmem [thread:$0]  %s369, 1024, %s371, [#allocation6], 128, 128, 8
        $region40: #{predictor_forward.1} parent=11 // pred_fallthru
          _
        // Predicated region
        $region41: #{predictor_forward.1} parent=11 // pred_check
          %p377 = pneg %p220
        $region42: #{predictor_forward.1} parent=11 // pred_check_branch
          %379 = sbr.rel (%p377) target = $region44
        $region43: #{predictor_forward.1} parent=11 // pred_region
          _
        $region44: #{predictor_forward.1} parent=11 // pred_fallthru
          _
        // Predicated region
        $region45: #{predictor_forward.1} parent=11 // pred_check
          %p380 = pneg %p241
        $region46: #{predictor_forward.1} parent=11 // pred_check_branch
          %382 = sbr.rel (%p380) target = $region48
        $region47: #{predictor_forward.1} parent=11 // pred_region
          _
        $region48: #{predictor_forward.1} parent=11 // pred_fallthru
          _
        // Predicated region
        $region49: #{predictor_forward.1} parent=11 // pred_check
          %p383 = pneg %p262
        $region50: #{predictor_forward.1} parent=11 // pred_check_branch
          %385 = sbr.rel (%p383) target = $region52
        $region51: #{predictor_forward.1} parent=11 // pred_region
          _
        $region52: #{predictor_forward.1} parent=11 // pred_fallthru
          _
        // Predicated region
        $region53: #{predictor_forward.1} parent=11 // pred_check
          %p386 = pneg %p283
        $region54: #{predictor_forward.1} parent=11 // pred_check_branch
          %388 = sbr.rel (%p386) target = $region56
        $region55: #{predictor_forward.1} parent=11 // pred_region
          _
        $region56: #{predictor_forward.1} parent=11 // pred_fallthru
          _
        // Predicated region
        $region57: #{predictor_forward.1} parent=11 // pred_check
          %p389 = pneg %p304
        $region58: #{predictor_forward.1} parent=11 // pred_check_branch
          %391 = sbr.rel (%p389) target = $region60
        $region59: #{predictor_forward.1} parent=11 // pred_region
          _
        $region60: #{predictor_forward.1} parent=11 // pred_fallthru
          _
      $region12: #{predictor_forward.1} parent=5 // pred_fallthru
        _
      %p392 = scmp.lt.s32.totalorder %s26, 2
      // Predicated region
      $region61: #{predictor_forward.1} parent=5 // pred_check
        %p393 = pneg %p392
      $region62: #{predictor_forward.1} parent=5 // pred_check_branch
        %395 = sbr.rel (%p393) target = $region64
      $region63: #{predictor_forward.1} parent=5 // pred_region
        // Predicated region
        $region65: #{predictor_forward.1} parent=63 // pred_check
          %p396 = pneg %p46
        $region66: #{predictor_forward.1} parent=63 // pred_check_branch
          %398 = sbr.rel (%p396) target = $region68
        $region67: #{predictor_forward.1} parent=63 // pred_region
          %s399 = sand.u32 %s36, 1
          %s400 = scalar_lea.sflag [#allocation3], %s399
          %s401 = sand.u32 %s36, 1
          %s402 = smul.addr %s401, 8
          %s403 = scalar_lea.vmem [#allocation2], %s402
          %405 = vsyncadd %s400, 0
          %s406 = smul.addr %s26, 8
          %s407 = scalar_lea.hbm %s0, %s406
          %s409 = sshll.u32 %s407, 4
          %s410 = int_to_ptr.hbm [resolvable:$true] %s409
          %s411 = sshll.u32 %s403, 4
          %s412 = int_to_ptr.vmem [resolvable:$true] %s411
          %414 = dma.hbm_to_vmem [thread:$0]  %s410, 128, %s412, %s400
        $region68: #{predictor_forward.1} parent=63 // pred_fallthru
          _
      $region64: #{predictor_forward.1} parent=5 // pred_fallthru
        _
      %p415 = scmp.le.s32.totalorder 1, %s26
      %p416 = scmp.lt.s32.totalorder %s26, 3
      %p417 = pnand %p415, %p416
      %p418 = pneg %p417
      // Predicated region
      $region69: #{predictor_forward.1} parent=5 // pred_check
        _
      $region70: #{predictor_forward.1} parent=5 // pred_check_branch
        %420 = sbr.rel (%p417) target = $region72
      $region71: #{predictor_forward.1} parent=5 // pred_region
        %s421 = ssub.s32 %s26, 1
        %s422 = sand.u32 %s39, 1
        %s423 = scalar_lea.sflag [#allocation3], %s422
        %s424 = sand.u32 %s39, 1
        %s425 = smul.addr %s424, 8
        %s426 = scalar_lea.vmem [#allocation2], %s425
        // Predicated region
        $region73: #{predictor_forward.1} parent=71 // pred_check
          %p427 = pneg %p52
        $region74: #{predictor_forward.1} parent=71 // pred_check_branch
          %429 = sbr.rel (%p427) target = $region76
        $region75: #{predictor_forward.1} parent=71 // pred_region
          %431 = dma.done %s423, 128
        $region76: #{predictor_forward.1} parent=71 // pred_fallthru
          _
        // Predicated region
        $region77: #{predictor_forward.1} parent=71 // pred_check
          %p432 = pneg %p199
        $region78: #{predictor_forward.1} parent=71 // pred_check_branch
          %434 = sbr.rel (%p432) target = $region80
        $region79: #{predictor_forward.1} parent=71 // pred_region
          %436 = dma.done [#allocation6], 1024
        $region80: #{predictor_forward.1} parent=71 // pred_fallthru
          _
        %s437 = sand.u32 %s39, 1
        %s438 = scalar_lea.sflag [#allocation3], %s437
        %s439 = sand.u32 %s39, 1
        %s440 = smul.addr %s439, 8
        %s441 = scalar_lea.vmem [#allocation2], %s440
        %p442 = pneg %p52
        %p443 = pneg %p49
        %p444 = pneg %p73
        %p445 = pneg %p70
        %p446 = pneg %p94
        %p447 = pneg %p91
        %p448 = pneg %p115
        %p449 = pneg %p112
        %p450 = pneg %p136
        %p451 = pneg %p133
        %p452 = pneg %p157
        %p453 = pneg %p154
        %p454 = pneg %p178
        %p455 = pneg %p175
        %p456 = pneg %p199
        %p457 = pneg %p196
        %p458 = pneg %p220
        %p459 = pneg %p217
        %p460 = pneg %p241
        %p461 = pneg %p238
        %p462 = pneg %p262
        %p463 = pneg %p259
        %p464 = pneg %p283
        %p465 = pneg %p280
        %p466 = pneg %p304
        %p467 = pneg %p301
        %p468 = pneg %p330
        %p469 = pneg %p327
        %s470 = sand.u32 %s317, 1
        %s471 = scalar_lea.sflag [#allocation4], %s470
        %s472 = sand.u32 %s317, 1
        %s473 = smul.addr %s472, 8
        %s474 = scalar_lea.vmem [#allocation7], %s473
        %v475 = vld [vmem:[%s426] sm:$0xff]
        %v476 = vld [vmem:[%s1] sm:$0xff]
        %v477 = vld [vmem:[%s1 + $0x8] sm:$0xff]
        %v478 = vld [vmem:[%s1 + $0x10] sm:$0xff]
        %v479 = vld [vmem:[%s1 + $0x18] sm:$0xff]
        %v480 = vld [vmem:[%s2] sm:$0x1]
        %v481 = vld [vmem:[%s3] sm:$0x1]
        %vm482 = vcmask 261120
        %v484 = vsel %vm482, %v475, 0
        %486 = vmatpush.msra.mxu0 0.0
        %487 = vmatpush.msra.mxu0 0.0
        %488 = vmatpush.msra.mxu0 0.0
        %489 = vmatpush.msra.mxu0 0.0
        %490 = vmatpush.msra.mxu0 0.0
        %491 = vmatpush.msra.mxu0 0.0
        %492 = vmatpush.msra.mxu0 0.0
        %493 = vmatpush.msra.mxu0 0.0
        %494 = vmatpush.msra.mxu0 0.0
        %495 = vmatpush.msra.mxu0 0.0
        %496 = vmatpush.msra.mxu0 0.0
        %497 = vmatpush.msra.mxu0 0.0
        %498 = vmatpush.msra.mxu0 %v479
        %499 = vmatpush.msra.mxu0 %v478
        %500 = vmatpush.msra.mxu0 %v477
        %501 = vmatpush.msra.mxu0 %v476
        %502 = vmatmul.f32.gmra.mxu0 %v484
        %v503 = vpop.f32.mrf.mxu0
        %v504 = vadd.f32 0.0, %v503
        %505 = vdwg.mxu0
        %v507 = vperm.slane %v480, 0
        %v509 = vmul.f32 %v504, %v507
        %v511 = vperm.slane %v481, 0
        %v513 = vadd.f32 %v509, %v511
        %v514 = vmax.f32 %v513, 0.0
        %v515 = vld [vmem:[%s4] sm:$0xff]
        %v516 = vld [vmem:[%s4 + $0x8] sm:$0xff]
        %v517 = vld [vmem:[%s4 + $0x10] sm:$0xff]
        %v518 = vld [vmem:[%s4 + $0x18] sm:$0xff]
        %v519 = vld [vmem:[%s4 + $0x20] sm:$0xff]
        %v520 = vld [vmem:[%s4 + $0x28] sm:$0xff]
        %v521 = vld [vmem:[%s4 + $0x30] sm:$0xff]
        %v522 = vld [vmem:[%s4 + $0x38] sm:$0xff]
        %v523 = vld [vmem:[%s5] sm:$0x1]
        %v524 = vld [vmem:[%s6] sm:$0x1]
        %vm525 = vcmask 523264
        %v527 = vsel %vm525, %v514, 0
        %529 = vmatpush.msra.mxu0 0.0
        %530 = vmatpush.msra.mxu0 0.0
        %531 = vmatpush.msra.mxu0 0.0
        %532 = vmatpush.msra.mxu0 0.0
        %533 = vmatpush.msra.mxu0 0.0
        %534 = vmatpush.msra.mxu0 0.0
        %535 = vmatpush.msra.mxu0 0.0
        %536 = vmatpush.msra.mxu0 0.0
        %537 = vmatpush.msra.mxu0 %v522
        %538 = vmatpush.msra.mxu0 %v521
        %539 = vmatpush.msra.mxu0 %v520
        %540 = vmatpush.msra.mxu0 %v519
        %541 = vmatpush.msra.mxu0 %v518
        %542 = vmatpush.msra.mxu0 %v517
        %543 = vmatpush.msra.mxu0 %v516
        %544 = vmatpush.msra.mxu0 %v515
        %545 = vmatmul.f32.gmra.mxu0 %v527
        %v546 = vpop.f32.mrf.mxu0
        %v547 = vadd.f32 0.0, %v546
        %548 = vdwg.mxu0
        %v550 = vperm.slane %v523, 0
        %v552 = vmul.f32 %v547, %v550
        %v554 = vperm.slane %v524, 0
        %v556 = vadd.f32 %v552, %v554
        %v557 = vmax.f32 %v556, 0.0
        %v558 = vld [vmem:[#allocation5] sm:$0xff]
        %v559 = vld [vmem:[#allocation5 + $0x8] sm:$0xff]
        %v560 = vld [vmem:[#allocation5 + $0x10] sm:$0xff]
        %v561 = vld [vmem:[#allocation5 + $0x18] sm:$0xff]
        %v562 = vld [vmem:[#allocation5 + $0x20] sm:$0xff]
        %v563 = vld [vmem:[#allocation5 + $0x28] sm:$0xff]
        %v564 = vld [vmem:[#allocation5 + $0x30] sm:$0xff]
        %v565 = vld [vmem:[#allocation5 + $0x38] sm:$0xff]
        %v566 = vld [vmem:[%s8] sm:$0x1]
        %v567 = vld [vmem:[%s9] sm:$0x1]
        %v569 = vsel %vm525, %v557, 0
        %571 = vmatpush.msra.mxu0 0.0
        %572 = vmatpush.msra.mxu0 0.0
        %573 = vmatpush.msra.mxu0 0.0
        %574 = vmatpush.msra.mxu0 0.0
        %575 = vmatpush.msra.mxu0 0.0
        %576 = vmatpush.msra.mxu0 0.0
        %577 = vmatpush.msra.mxu0 0.0
        %578 = vmatpush.msra.mxu0 0.0
        %579 = vmatpush.msra.mxu0 %v565
        %580 = vmatpush.msra.mxu0 %v564
        %581 = vmatpush.msra.mxu0 %v563
        %582 = vmatpush.msra.mxu0 %v562
        %583 = vmatpush.msra.mxu0 %v561
        %584 = vmatpush.msra.mxu0 %v560
        %585 = vmatpush.msra.mxu0 %v559
        %586 = vmatpush.msra.mxu0 %v558
        %587 = vmatmul.f32.gmra.mxu0 %v569
        %v588 = vpop.f32.mrf.mxu0
        %v589 = vadd.f32 0.0, %v588
        %590 = vdwg.mxu0
        %v592 = vperm.slane %v566, 0
        %v594 = vmul.f32 %v589, %v592
        %v596 = vperm.slane %v567, 0
        %v598 = vadd.f32 %v594, %v596
        %v599 = vmax.f32 %v598, 0.0
        %v600 = vld [vmem:[%s10] sm:$0xff]
        %v601 = vld [vmem:[%s10 + $0x8] sm:$0xff]
        %v602 = vld [vmem:[%s10 + $0x10] sm:$0xff]
        %v603 = vld [vmem:[%s10 + $0x18] sm:$0xff]
        %v604 = vld [vmem:[%s10 + $0x20] sm:$0xff]
        %v605 = vld [vmem:[%s10 + $0x28] sm:$0xff]
        %v606 = vld [vmem:[%s10 + $0x30] sm:$0xff]
        %v607 = vld [vmem:[%s10 + $0x38] sm:$0xff]
        %v608 = vld [vmem:[%s11] sm:$0x1]
        %v609 = vld [vmem:[%s12] sm:$0x1]
        %v611 = vsel %vm525, %v599, 0
        %613 = vmatpush.msra.mxu0 0.0
        %614 = vmatpush.msra.mxu0 0.0
        %615 = vmatpush.msra.mxu0 0.0
        %616 = vmatpush.msra.mxu0 0.0
        %617 = vmatpush.msra.mxu0 0.0
        %618 = vmatpush.msra.mxu0 0.0
        %619 = vmatpush.msra.mxu0 0.0
        %620 = vmatpush.msra.mxu0 0.0
        %621 = vmatpush.msra.mxu0 %v607
        %622 = vmatpush.msra.mxu0 %v606
        %623 = vmatpush.msra.mxu0 %v605
        %624 = vmatpush.msra.mxu0 %v604
        %625 = vmatpush.msra.mxu0 %v603
        %626 = vmatpush.msra.mxu0 %v602
        %627 = vmatpush.msra.mxu0 %v601
        %628 = vmatpush.msra.mxu0 %v600
        %629 = vmatmul.f32.gmra.mxu0 %v611
        %v630 = vpop.f32.mrf.mxu0
        %v631 = vadd.f32 0.0, %v630
        %632 = vdwg.mxu0
        %v634 = vperm.slane %v608, 0
        %v636 = vmul.f32 %v631, %v634
        %v638 = vperm.slane %v609, 0
        %v640 = vadd.f32 %v636, %v638
        %641 = vst.msk [vmem:[%s474] sm:$0xff] %vm482, %v640
        %s642 = sand.u32 %s317, 1
        %s643 = scalar_lea.sflag [#allocation4], %s642
        %s644 = sand.u32 %s317, 1
        %s645 = smul.addr %s644, 8
        %s646 = scalar_lea.vmem [#allocation7], %s645
        // Predicated region
        $region81: #{predictor_forward.1} parent=71 // pred_check
          %p647 = pneg %p327
        $region82: #{predictor_forward.1} parent=71 // pred_check_branch
          %649 = sbr.rel (%p647) target = $region84
        $region83: #{predictor_forward.1} parent=71 // pred_region
          %651 = vsyncadd %s643, 0
          %s652 = smul.addr %s31, 8
          %s653 = scalar_lea.hbm %s13, %s652
          %s655 = sshll.u32 %s646, 4
          %s656 = int_to_ptr.vmem [resolvable:$true] %s655
          %s657 = sshll.u32 %s653, 4
          %s658 = int_to_ptr.hbm [resolvable:$true] %s657
          %660 = dma.vmem_to_hbm [thread:$0]  %s656, 128, %s658, %s643
        $region84: #{predictor_forward.1} parent=71 // pred_fallthru
          _
      $region72: #{predictor_forward.1} parent=5 // pred_fallthru
        _
      %p661 = scmp.le.s32.totalorder 2, %s26
      // Predicated region
      $region85: #{predictor_forward.1} parent=5 // pred_check
        %p662 = pneg %p661
      $region86: #{predictor_forward.1} parent=5 // pred_check_branch
        %664 = sbr.rel (%p662) target = $region88
      $region87: #{predictor_forward.1} parent=5 // pred_region
        %s665 = ssub.s32 %s26, 2
        // Predicated region
        $region89: #{predictor_forward.1} parent=87 // pred_check
          %p666 = pneg %p333
        $region90: #{predictor_forward.1} parent=87 // pred_check_branch
          %668 = sbr.rel (%p666) target = $region92
        $region91: #{predictor_forward.1} parent=87 // pred_region
          %s669 = sand.u32 %s318, 1
          %s670 = scalar_lea.sflag [#allocation4], %s669
          %s671 = sand.u32 %s318, 1
          %s672 = smul.addr %s671, 8
          %s673 = scalar_lea.vmem [#allocation7], %s672
          %675 = dma.done %s670, 128
        $region92: #{predictor_forward.1} parent=87 // pred_fallthru
          _
      $region88: #{predictor_forward.1} parent=5 // pred_fallthru
        _
    $region6: #{predictor_forward.1} parent=1 // loop_footer
      %s30 = sadd.s32 1, %s26
    $region7: #{predictor_forward.1} parent=1 // loop_footer_branch
      %25 = sbr.rel target = $region3
    $region8: #{predictor_forward.1} parent=1 // loop_exit
      _
    %676 = vsyncpa [#allocation3], 1
    %s677 = scalar_lea.sflag [#allocation3], 1
    %678 = vsyncpa %s677, 1
    %679 = vsyncpa [#allocation6], 1
    %680 = vsyncpa [#allocation4], 1
    %s681 = scalar_lea.sflag [#allocation4], 1
    %682 = vsyncpa %s681, 1

</llo_original>
